<compile_context>
chip_gen: v5e
topology: v5e:2x2
jax: 0.10.0
libtpu: 0.0.40
codegen_flags: <defaults>
</compile_context>

<pallas_src>
import jax
import jax.numpy as jnp
from jax.experimental import pallas as pl
from jax.experimental.pallas import tpu as pltpu

LANE = 128            # lane width: pad hidden / action OUTPUT dims up to this
NEG_BIG = -1e30       # finite "-inf" for padded action lanes (exp underflows to 0)


def _mlp_softmax_kernel(x_ref, w1_ref, b1_ref, w2_ref, b2_ref, w3_ref, b3_ref, o_ref):
    """One batch tile: 3 fused MXU matmuls + VPU ReLU/bias + stable softmax."""
    # Cast activations to the weight dtype (bf16 by default) so the MXU runs
    # at native bf16 rate; accumulation is forced to f32.
    x = x_ref[...].astype(w1_ref.dtype)                               # (TB, S)

    h1 = jnp.dot(x, w1_ref[...], preferred_element_type=jnp.float32) + b1_ref[...]
    h1 = jnp.maximum(h1, 0.0)

    h2 = jnp.dot(h1.astype(w2_ref.dtype), w2_ref[...],
                 preferred_element_type=jnp.float32) + b2_ref[...]
    h2 = jnp.maximum(h2, 0.0)

    logits = jnp.dot(h2.astype(w3_ref.dtype), w3_ref[...],
                     preferred_element_type=jnp.float32) + b3_ref[...]
    # Padded action lanes carry bias NEG_BIG (f32) -> exp() underflows to
    # exactly 0, so they contribute nothing to the softmax denominator.

    m = jnp.max(logits, axis=1, keepdims=True)
    e = jnp.exp(logits - m)
    denom = jnp.sum(e, axis=1, keepdims=True)
    # EXACT normalization: rows sum to 1 within f32 rounding (the approximate
    # EUP reciprocal was ~1e-3 off, which downstream normalization checks see).
    o_ref[...] = e / denom


def init_params(key, state_size, hidden_layer, action_size):
    """PyTorch-style uniform(-1/sqrt(fan_in), 1/sqrt(fan_in)) init (logical shapes).

    Weights stored as (in_features, out_features); biases as (1, out_features).
    """
    ks = jax.random.split(key, 6)

    def uni(k, shape, fan_in):
        bound = 1.0 / jnp.sqrt(jnp.float32(fan_in))
        return jax.random.uniform(k, shape, jnp.float32, -bound, bound)

    return {
        "w1": uni(ks[0], (state_size, hidden_layer), state_size),
        "b1": uni(ks[1], (1, hidden_layer), state_size),
        "w2": uni(ks[2], (hidden_layer, hidden_layer), hidden_layer),
        "b2": uni(ks[3], (1, hidden_layer), hidden_layer),
        "w3": uni(ks[4], (hidden_layer, action_size), hidden_layer),
        "b3": uni(ks[5], (1, action_size), hidden_layer),
    }


def pad_params(params, lane=LANE, mxu_dtype=jnp.bfloat16):
    """One-time lane padding of weights/biases. Only OUTPUT dims are padded.

    * Hidden / action output dims -> multiples of 128 (lane-dense stores, full
      MXU lanes).  The state (contraction) dim of w1 is left untouched.
    * Zero padding is semantics-preserving for hidden dims (ReLU(0)=0, zero
      rows/cols contribute nothing); padded *action* lanes get bias NEG_BIG so
      softmax assigns them exactly probability 0.
    * Weights are stored in `mxu_dtype` (bf16 by default: halves resident VMEM
      + HBM weight bytes, native MXU rate on v5e/v6e/v7x).  Biases stay f32 so
      all VPU/EUP math and the NEG_BIG trick remain exact.
    """
    S, H = params["w1"].shape
    A = params["w3"].shape[1]
    Hp = max(lane, ((H + lane - 1) // lane) * lane)
    Ap = max(lane, ((A + lane - 1) // lane) * lane)

    def pad2(a, r, c):
        return jnp.pad(a, ((0, r - a.shape[0]), (0, c - a.shape[1])))

    b3 = jnp.full((1, Ap), NEG_BIG, jnp.float32).at[:, :A].set(params["b3"])
    return {
        "w1": pad2(params["w1"], S, Hp).astype(mxu_dtype),
        "b1": pad2(params["b1"], 1, Hp).astype(jnp.float32),
        "w2": pad2(params["w2"], Hp, Hp).astype(mxu_dtype),
        "b2": pad2(params["b2"], 1, Hp).astype(jnp.float32),
        "w3": pad2(params["w3"], Hp, Ap).astype(mxu_dtype),
        "b3": b3,
    }


def _batch_tiling(batch, max_tile_b=512, split_threshold=256):
    """Pick (tile_b, num_tiles, padded_batch).

    * batch rounded up to a multiple of 8 only (sublane), never to 128 rows;
    * large batches stream in <=512-row tiles (per-step DMA near HBM roofline);
    * once the batch is big enough, force >=2 grid steps so the "parallel"
      batch axis can be sharded across both TensorCores on v7x (v5e/v6e are
      single-TC, where the extra step costs ~0.35 us — negligible).
    """
    b8 = ((batch + 7) // 8) * 8
    num_tiles = max(1, (b8 + max_tile_b - 1) // max_tile_b)
    if num_tiles == 1 and b8 >= split_threshold:
        num_tiles = 2
    tile_b = (((b8 + num_tiles - 1) // num_tiles) + 7) // 8 * 8
    return tile_b, num_tiles, tile_b * num_tiles


@jax.jit
def network_forward(x, padded_params):
    """x: (B, state_size); padded_params: output of pad_params.

    Returns (B, Ap) probabilities where Ap is the 128-padded action dim; the
    first `action_size` lanes are the softmax of the module, the padded lanes
    are exactly 0 (so argmax/sampling consumers can use the padded output
    directly — avoids an extra HBM pass to trim lanes).
    """
    w1, b1 = padded_params["w1"], padded_params["b1"]
    w2, b2 = padded_params["w2"], padded_params["b2"]
    w3, b3 = padded_params["w3"], padded_params["b3"]

    B, S = x.shape
    Hp = w1.shape[1]
    Ap = w3.shape[1]

    tile_b, num_tiles, Bp = _batch_tiling(B)
    if Bp != B:
        # Batch-only pad (to a multiple of 8 / the tile). State dim untouched.
        x = jnp.pad(x, ((0, Bp - B), (0, 0)))

    const = lambda i: (0, 0)          # weights: same (only) block every step -> VMEM-resident
    batch_map = lambda i: (i, 0)      # activations: tile along batch

    flops = 2 * Bp * (S * Hp + Hp * Hp + Hp * Ap)
    transcendentals = Bp * Ap         # exp per (padded) logit
    bytes_accessed = int(
        Bp * S * x.dtype.itemsize
        + sum(int(a.size) * a.dtype.itemsize for a in (w1, b1, w2, b2, w3, b3))
        + Bp * Ap * 4
    )

    out = pl.pallas_call(
        _mlp_softmax_kernel,
        out_shape=jax.ShapeDtypeStruct((Bp, Ap), jnp.float32),
        grid=(num_tiles,),
        in_specs=[
            pl.BlockSpec((tile_b, S), batch_map),    # x tile: no lane padding of S
            pl.BlockSpec((S, Hp), const),            # w1 (resident)
            pl.BlockSpec((1, Hp), const),            # b1
            pl.BlockSpec((Hp, Hp), const),           # w2
            pl.BlockSpec((1, Hp), const),            # b2
            pl.BlockSpec((Hp, Ap), const),           # w3
            pl.BlockSpec((1, Ap), const),            # b3
        ],
        out_specs=pl.BlockSpec((tile_b, Ap), batch_map),  # lane-dense (128-wide) store
        compiler_params=pltpu.CompilerParams(
            dimension_semantics=("parallel",),       # megacore-shardable on v7x
        ),
        cost_estimate=pl.CostEstimate(
            flops=flops,
            transcendentals=transcendentals,
            bytes_accessed=bytes_accessed,
        ),
    )(x, w1, b1, w2, b2, w3, b3)

    if Bp != B:
        out = out[:B]   # slice only the batch dim; padded action lanes stay (they are 0)
    return out


if __name__ == "__main__":
    # Small shapes consistent with the module's forward: x is (batch, state_size).
    batch, state_size, hidden_layer, action_size = 8, 16, 32, 8

    key = jax.random.PRNGKey(0)
    k_x, k_p = jax.random.split(key)
    x = jax.random.normal(k_x, (batch, state_size), dtype=jnp.float32)

    params = init_params(k_p, state_size, hidden_layer, action_size)

    # Pure-JAX reference on the logical (unpadded) f32 params — same semantics
    # as the torch module.
    def ref(x, p):
        h = jnp.maximum(x @ p["w1"] + p["b1"], 0.0)
        h = jnp.maximum(h @ p["w2"] + p["b2"], 0.0)
        logits = h @ p["w3"] + p["b3"]
        return jax.nn.softmax(logits, axis=1)

    expected = ref(x, params)

    # --- f32 MXU operands: faithful to the torch module's numerics ----------
    out_f32 = jax.block_until_ready(
        network_forward(x, pad_params(params, mxu_dtype=jnp.float32)))
    assert out_f32.shape == (batch, LANE)
    assert bool(jnp.all(out_f32[:, action_size:] < 1e-30))        # padded lanes = 0
    assert bool(jnp.allclose(jnp.sum(out_f32, axis=1), 1.0, atol=1e-4))
    assert bool(jnp.allclose(out_f32[:, :action_size], expected, atol=2e-3))

    # --- bf16 MXU operands (default perf path): f32 softmax, exact normalize -
    out_bf16 = jax.block_until_ready(network_forward(x, pad_params(params)))
    assert out_bf16.shape == (batch, LANE)
    assert bool(jnp.all(out_bf16[:, action_size:] < 1e-30))
    assert bool(jnp.allclose(jnp.sum(out_bf16, axis=1), 1.0, atol=1e-4))
    assert bool(jnp.allclose(out_bf16[:, :action_size], expected, atol=2e-2))

    print("KERNEL_OK")
</pallas_src>

<mosaic_0001>
module attributes {stable_mosaic.version = 11 : i64} {
  func.func @_mlp_softmax_kernel(%arg0: i32, %arg1: memref<8x16xf32, #tpu.memory_space<vmem>>, %arg2: memref<16x128xf32, #tpu.memory_space<vmem>>, %arg3: memref<1x128xf32, #tpu.memory_space<vmem>>, %arg4: memref<128x128xf32, #tpu.memory_space<vmem>>, %arg5: memref<1x128xf32, #tpu.memory_space<vmem>>, %arg6: memref<128x128xf32, #tpu.memory_space<vmem>>, %arg7: memref<1x128xf32, #tpu.memory_space<vmem>>, %arg8: memref<8x128xf32, #tpu.memory_space<vmem>>) attributes {dimension_semantics = [#tpu.dimension_semantics<parallel>], iteration_bounds = array<i64: 1>, scalar_prefetch = 0 : i64, scratch_operands = 0 : i64, tpu.core_type = #tpu.core_type<tc>, window_params = [{transform_indices = @transform_0, window_bounds = array<i64: 8, 16>}, {pipeline_mode = #tpu.pipeline_mode<synchronous>, transform_indices = @transform_1, window_bounds = array<i64: 16, 128>}, {pipeline_mode = #tpu.pipeline_mode<synchronous>, transform_indices = @transform_2, window_bounds = array<i64: 1, 128>}, {pipeline_mode = #tpu.pipeline_mode<synchronous>, transform_indices = @transform_3, window_bounds = array<i64: 128, 128>}, {pipeline_mode = #tpu.pipeline_mode<synchronous>, transform_indices = @transform_4, window_bounds = array<i64: 1, 128>}, {pipeline_mode = #tpu.pipeline_mode<synchronous>, transform_indices = @transform_5, window_bounds = array<i64: 128, 128>}, {pipeline_mode = #tpu.pipeline_mode<synchronous>, transform_indices = @transform_6, window_bounds = array<i64: 1, 128>}, {transform_indices = @transform_7, window_bounds = array<i64: 8, 128>}]} {
    %c0 = arith.constant 0 : index
    %c0_0 = arith.constant 0 : index
    %0 = vector.load %arg1[%c0, %c0_0] : memref<8x16xf32, #tpu.memory_space<vmem>>, vector<8x16xf32>
    %c0_1 = arith.constant 0 : index
    %c0_2 = arith.constant 0 : index
    %1 = vector.load %arg2[%c0_1, %c0_2] : memref<16x128xf32, #tpu.memory_space<vmem>>, vector<16x128xf32>
    %cst = arith.constant dense<0.000000e+00> : vector<8x128xf32>
    %2 = tpu.matmul %0, %1, %cst {dimension_numbers = #tpu.dot_dimension_numbers<[1], [0], [0], [1], [0, 0, 1, 1], [], []>} : vector<8x16xf32>, vector<16x128xf32>, vector<8x128xf32> -> vector<8x128xf32>
    %c0_3 = arith.constant 0 : index
    %c0_4 = arith.constant 0 : index
    %3 = vector.load %arg3[%c0_3, %c0_4] : memref<1x128xf32, #tpu.memory_space<vmem>>, vector<1x128xf32>
    %4 = vector.broadcast %3 : vector<1x128xf32> to vector<8x128xf32>
    %5 = arith.addf %2, %4 : vector<8x128xf32>
    %cst_5 = arith.constant 0.000000e+00 : f32
    %6 = vector.broadcast %cst_5 : f32 to vector<8x128xf32>
    %7 = arith.maximumf %5, %6 : vector<8x128xf32>
    %c0_6 = arith.constant 0 : index
    %c0_7 = arith.constant 0 : index
    %8 = vector.load %arg4[%c0_6, %c0_7] : memref<128x128xf32, #tpu.memory_space<vmem>>, vector<128x128xf32>
    %cst_8 = arith.constant dense<0.000000e+00> : vector<8x128xf32>
    %9 = tpu.matmul %7, %8, %cst_8 {dimension_numbers = #tpu.dot_dimension_numbers<[1], [0], [0], [1], [0, 0, 1, 1], [], []>} : vector<8x128xf32>, vector<128x128xf32>, vector<8x128xf32> -> vector<8x128xf32>
    %c0_9 = arith.constant 0 : index
    %c0_10 = arith.constant 0 : index
    %10 = vector.load %arg5[%c0_9, %c0_10] : memref<1x128xf32, #tpu.memory_space<vmem>>, vector<1x128xf32>
    %11 = vector.broadcast %10 : vector<1x128xf32> to vector<8x128xf32>
    %12 = arith.addf %9, %11 : vector<8x128xf32>
    %cst_11 = arith.constant 0.000000e+00 : f32
    %13 = vector.broadcast %cst_11 : f32 to vector<8x128xf32>
    %14 = arith.maximumf %12, %13 : vector<8x128xf32>
    %c0_12 = arith.constant 0 : index
    %c0_13 = arith.constant 0 : index
    %15 = vector.load %arg6[%c0_12, %c0_13] : memref<128x128xf32, #tpu.memory_space<vmem>>, vector<128x128xf32>
    %cst_14 = arith.constant dense<0.000000e+00> : vector<8x128xf32>
    %16 = tpu.matmul %14, %15, %cst_14 {dimension_numbers = #tpu.dot_dimension_numbers<[1], [0], [0], [1], [0, 0, 1, 1], [], []>} : vector<8x128xf32>, vector<128x128xf32>, vector<8x128xf32> -> vector<8x128xf32>
    %c0_15 = arith.constant 0 : index
    %c0_16 = arith.constant 0 : index
    %17 = vector.load %arg7[%c0_15, %c0_16] : memref<1x128xf32, #tpu.memory_space<vmem>>, vector<1x128xf32>
    %18 = vector.broadcast %17 : vector<1x128xf32> to vector<8x128xf32>
    %19 = arith.addf %16, %18 : vector<8x128xf32>
    %cst_17 = arith.constant dense<0xFF800000> : vector<8xf32>
    %20 = vector.multi_reduction <maximumf>, %19, %cst_17 [1] : vector<8x128xf32> to vector<8xf32>
    %21 = vector.shape_cast %20 : vector<8xf32> to vector<8x1xf32>
    %22 = vector.broadcast %21 : vector<8x1xf32> to vector<8x128xf32>
    %23 = arith.subf %19, %22 : vector<8x128xf32>
    %24 = math.exp %23 : vector<8x128xf32>
    %cst_18 = arith.constant dense<0.000000e+00> : vector<8xf32>
    %25 = vector.multi_reduction <add>, %24, %cst_18 [1] : vector<8x128xf32> to vector<8xf32>
    %26 = vector.shape_cast %25 : vector<8xf32> to vector<8x1xf32>
    %27 = vector.broadcast %26 : vector<8x1xf32> to vector<8x128xf32>
    %28 = arith.divf %24, %27 : vector<8x128xf32>
    %c0_19 = arith.constant 0 : index
    %c0_20 = arith.constant 0 : index
    %29 = vector.load %arg8[%c0_19, %c0_20] : memref<8x128xf32, #tpu.memory_space<vmem>>, vector<8x128xf32>
    tpu.vector_store %arg8[%c0_19, %c0_20], %28 {strides = array<i32>} : memref<8x128xf32, #tpu.memory_space<vmem>>, vector<8x128xf32>,
    return
  }
  func.func @transform_0(%arg0: i32) -> (i32, i32) {
    %c0_i32 = arith.constant 0 : i32
    %c0_i32_0 = arith.constant 0 : i32
    return %arg0, %c0_i32 : i32, i32
  }
  func.func @transform_1(%arg0: i32) -> (i32, i32) {
    %c0_i32 = arith.constant 0 : i32
    %c0_i32_0 = arith.constant 0 : i32
    %c0_i32_1 = arith.constant 0 : i32
    return %c0_i32, %c0_i32_0 : i32, i32
  }
  func.func @transform_2(%arg0: i32) -> (i32, i32) {
    %c0_i32 = arith.constant 0 : i32
    %c0_i32_0 = arith.constant 0 : i32
    %c0_i32_1 = arith.constant 0 : i32
    return %c0_i32, %c0_i32_0 : i32, i32
  }
  func.func @transform_3(%arg0: i32) -> (i32, i32) {
    %c0_i32 = arith.constant 0 : i32
    %c0_i32_0 = arith.constant 0 : i32
    %c0_i32_1 = arith.constant 0 : i32
    return %c0_i32, %c0_i32_0 : i32, i32
  }
  func.func @transform_4(%arg0: i32) -> (i32, i32) {
    %c0_i32 = arith.constant 0 : i32
    %c0_i32_0 = arith.constant 0 : i32
    %c0_i32_1 = arith.constant 0 : i32
    return %c0_i32, %c0_i32_0 : i32, i32
  }
  func.func @transform_5(%arg0: i32) -> (i32, i32) {
    %c0_i32 = arith.constant 0 : i32
    %c0_i32_0 = arith.constant 0 : i32
    %c0_i32_1 = arith.constant 0 : i32
    return %c0_i32, %c0_i32_0 : i32, i32
  }
  func.func @transform_6(%arg0: i32) -> (i32, i32) {
    %c0_i32 = arith.constant 0 : i32
    %c0_i32_0 = arith.constant 0 : i32
    %c0_i32_1 = arith.constant 0 : i32
    return %c0_i32, %c0_i32_0 : i32, i32
  }
  func.func @transform_7(%arg0: i32) -> (i32, i32) {
    %c0_i32 = arith.constant 0 : i32
    %c0_i32_0 = arith.constant 0 : i32
    return %arg0, %c0_i32 : i32, i32
  }
}

</mosaic_0001>

<llo_original>
// kernel: network_forward.1
$region0: #{network_forward.1}
  #allocation0 [shape = 'u32[]', space=smem, size = 0x4, offset = 0x4, fixed_abs, tag = 'smem constant byte address 0x4 - core index']
  #allocation1 [shape = 'u32[72,128]{1,0:T(1,128)}', space=vmem, size = 0x9000, scoped, tag = 'internal scratch']
  %s0 = inlined_call_operand.hbm [shape: f32[8,16], index: 0, kind: input, shape index: {}]
  %s1 = inlined_call_operand.hbm [shape: f32[16,128], index: 1, kind: input, shape index: {}]
  %s2 = inlined_call_operand.hbm [shape: f32[1,128], index: 2, kind: input, shape index: {}]
  %s3 = inlined_call_operand.hbm [shape: f32[128,128], index: 3, kind: input, shape index: {}]
  %s4 = inlined_call_operand.vmem [shape: f32[1,128], index: 4, kind: input, shape index: {}]
  %s5 = inlined_call_operand.hbm [shape: f32[128,128], index: 5, kind: input, shape index: {}]
  %s6 = inlined_call_operand.vmem [shape: f32[1,128], index: 6, kind: input, shape index: {}]
  %s7 = inlined_call_operand.hbm [shape: f32[8,128], index: 7, kind: output, shape index: {}]
  %s8 = sld [smem:[#allocation0]]
  $region58: #{network_forward.1} parent=0
    _
  %s10 = ssub.s32 1, %s8
  %s11 = scalar_select 0, %s10, %s8
  $region1: #{network_forward.1} parent=0
    #allocation2 [shape = 'u8[4096]{0}', space=vmem, size = 0x1000, scoped, tag = 'input window, operand 0, single buffered']
    #allocation3 [shape = 's32[1]{0}', space=sflag, size = 0x4, scoped, tag = 'scoped memory for network_forward.1']
    #allocation4 [shape = 's32[1]{0}', space=sflag, size = 0x4, scoped, tag = 'scoped memory for network_forward.1']
    #allocation5 [shape = 'u8[8192]{0}', space=vmem, size = 0x2000, scoped, tag = 'input window, operand 1, single buffered']
    #allocation6 [shape = 's32[1]{0}', space=sflag, size = 0x4, scoped, tag = 'scoped memory for network_forward.1']
    #allocation7 [shape = 'u8[512]{0}', space=vmem, size = 0x400, scoped, tag = 'input window, operand 2, single buffered']
    #allocation8 [shape = 'u8[65536]{0}', space=vmem, size = 0x10000, scoped, tag = 'input window, operand 3, single buffered']
    #allocation9 [shape = 's32[1]{0}', space=sflag, size = 0x4, scoped, tag = 'scoped memory for network_forward.1']
    #allocation10 [shape = 'u8[65536]{0}', space=vmem, size = 0x10000, scoped, tag = 'input window, operand 5, single buffered']
    #allocation11 [shape = 'u8[4096]{0}', space=vmem, size = 0x1000, scoped, tag = 'output window, operand 0, single buffered']
    %12 = vsyncpa [#allocation3], 0
    %13 = vsyncpa [#allocation6], 0
    %14 = vsyncpa [#allocation9], 0
    %15 = vsyncpa [#allocation4], 0
    // Predicated region
    $region2: #{network_forward.1} parent=1 // pred_check
      _
    $region3: #{network_forward.1} parent=1 // pred_check_branch
      %17 = sbr.rel (0) target = $region5
    $region4: #{network_forward.1} parent=1 // pred_region
      %19 = vsyncadd [#allocation3], 0
      %s21 = sshll.u32 %s0, 4
      %s22 = int_to_ptr.hbm [resolvable:$true] %s21
      %s23 = sshll.u32 [#allocation2], 4
      %s24 = int_to_ptr.vmem [resolvable:$true] %s23
      %26 = dma.hbm_to_vmem [thread:$0]  %s22, 128, %s24, [#allocation3]
    $region5: #{network_forward.1} parent=1 // pred_fallthru
      _
    // Predicated region
    $region6: #{network_forward.1} parent=1 // pred_check
      _
    $region7: #{network_forward.1} parent=1 // pred_check_branch
      %28 = sbr.rel (0) target = $region9
    $region8: #{network_forward.1} parent=1 // pred_region
      %30 = vsyncadd [#allocation6], 0
      %s31 = sshll.u32 %s1, 4
      %s32 = int_to_ptr.hbm [resolvable:$true] %s31
      %s33 = sshll.u32 [#allocation5], 4
      %s34 = int_to_ptr.vmem [resolvable:$true] %s33
      %39 = dma.hbm_to_vmem [thread:$0]  %s32, 256, %s34, [#allocation6], 128, 128, 8
    $region9: #{network_forward.1} parent=1 // pred_fallthru
      _
    // Predicated region
    $region10: #{network_forward.1} parent=1 // pred_check
      _
    $region11: #{network_forward.1} parent=1 // pred_check_branch
      %41 = sbr.rel (0) target = $region13
    $region12: #{network_forward.1} parent=1 // pred_region
      %43 = vsyncadd [#allocation6], 0
      %s45 = sshll.u32 %s2, 4
      %s46 = int_to_ptr.hbm [resolvable:$true] %s45
      %s47 = sshll.u32 [#allocation7], 4
      %s48 = int_to_ptr.vmem [resolvable:$true] %s47
      %50 = dma.hbm_to_vmem [thread:$0]  %s46, 16, %s48, [#allocation6]
    $region13: #{network_forward.1} parent=1 // pred_fallthru
      _
    // Predicated region
    $region14: #{network_forward.1} parent=1 // pred_check
      _
    $region15: #{network_forward.1} parent=1 // pred_check_branch
      %52 = sbr.rel (0) target = $region17
    $region16: #{network_forward.1} parent=1 // pred_region
      %54 = vsyncadd [#allocation9], 0
      %s55 = sshll.u32 %s3, 4
      %s56 = int_to_ptr.hbm [resolvable:$true] %s55
      %s57 = sshll.u32 [#allocation8], 4
      %s58 = int_to_ptr.vmem [resolvable:$true] %s57
      %63 = dma.hbm_to_vmem [thread:$0]  %s56, 2048, %s58, [#allocation9], 128, 128, 8
    $region17: #{network_forward.1} parent=1 // pred_fallthru
      _
    // Predicated region
    $region18: #{network_forward.1} parent=1 // pred_check
      _
    $region19: #{network_forward.1} parent=1 // pred_check_branch
      %65 = sbr.rel (0) target = $region21
    $region20: #{network_forward.1} parent=1 // pred_region
      _
    $region21: #{network_forward.1} parent=1 // pred_fallthru
      _
    // Predicated region
    $region22: #{network_forward.1} parent=1 // pred_check
      _
    $region23: #{network_forward.1} parent=1 // pred_check_branch
      %67 = sbr.rel (0) target = $region25
    $region24: #{network_forward.1} parent=1 // pred_region
      %69 = vsyncadd [#allocation9], 0
      %s70 = sshll.u32 %s5, 4
      %s71 = int_to_ptr.hbm [resolvable:$true] %s70
      %s72 = sshll.u32 [#allocation10], 4
      %s73 = int_to_ptr.vmem [resolvable:$true] %s72
      %78 = dma.hbm_to_vmem [thread:$0]  %s71, 2048, %s73, [#allocation9], 128, 128, 8
    $region25: #{network_forward.1} parent=1 // pred_fallthru
      _
    // Predicated region
    $region26: #{network_forward.1} parent=1 // pred_check
      _
    $region27: #{network_forward.1} parent=1 // pred_check_branch
      %80 = sbr.rel (0) target = $region29
    $region28: #{network_forward.1} parent=1 // pred_region
      _
    $region29: #{network_forward.1} parent=1 // pred_fallthru
      _
    // Predicated region
    $region30: #{network_forward.1} parent=1 // pred_check
      _
    $region31: #{network_forward.1} parent=1 // pred_check_branch
      %82 = sbr.rel (0) target = $region33
    $region32: #{network_forward.1} parent=1 // pred_region
      %84 = dma.done [#allocation3], 128
    $region33: #{network_forward.1} parent=1 // pred_fallthru
      _
    // Predicated region
    $region34: #{network_forward.1} parent=1 // pred_check
      _
    $region35: #{network_forward.1} parent=1 // pred_check_branch
      %86 = sbr.rel (0) target = $region37
    $region36: #{network_forward.1} parent=1 // pred_region
      %88 = dma.done [#allocation6], 256
    $region37: #{network_forward.1} parent=1 // pred_fallthru
      _
    // Predicated region
    $region38: #{network_forward.1} parent=1 // pred_check
      _
    $region39: #{network_forward.1} parent=1 // pred_check_branch
      %90 = sbr.rel (0) target = $region41
    $region40: #{network_forward.1} parent=1 // pred_region
      %92 = dma.done [#allocation6], 16
    $region41: #{network_forward.1} parent=1 // pred_fallthru
      _
    // Predicated region
    $region42: #{network_forward.1} parent=1 // pred_check
      _
    $region43: #{network_forward.1} parent=1 // pred_check_branch
      %94 = sbr.rel (0) target = $region45
    $region44: #{network_forward.1} parent=1 // pred_region
      %96 = dma.done [#allocation9], 2048
    $region45: #{network_forward.1} parent=1 // pred_fallthru
      _
    // Predicated region
    $region46: #{network_forward.1} parent=1 // pred_check
      _
    $region47: #{network_forward.1} parent=1 // pred_check_branch
      %98 = sbr.rel (0) target = $region49
    $region48: #{network_forward.1} parent=1 // pred_region
      %100 = dma.done [#allocation9], 2048
    $region49: #{network_forward.1} parent=1 // pred_fallthru
      _
    %v101 = vld [vmem:[#allocation2] sm:$0xff]
    %v102 = vld [vmem:[#allocation5] sm:$0xff]
    %v103 = vld [vmem:[#allocation5 + $0x8] sm:$0xff]
    %v104 = vld [vmem:[#allocation7] sm:$0x1]
    %v106 = vperm.slane %v104, 0
    %vm108 = vcmask 130048
    %v110 = vsel %vm108, %v101, 0
    %112 = vmatpush.msra.mxu0 0.0
    %113 = vmatpush.msra.mxu0 0.0
    %114 = vmatpush.msra.mxu0 0.0
    %115 = vmatpush.msra.mxu0 0.0
    %116 = vmatpush.msra.mxu0 0.0
    %117 = vmatpush.msra.mxu0 0.0
    %118 = vmatpush.msra.mxu0 0.0
    %119 = vmatpush.msra.mxu0 0.0
    %120 = vmatpush.msra.mxu0 0.0
    %121 = vmatpush.msra.mxu0 0.0
    %122 = vmatpush.msra.mxu0 0.0
    %123 = vmatpush.msra.mxu0 0.0
    %124 = vmatpush.msra.mxu0 0.0
    %125 = vmatpush.msra.mxu0 0.0
    %126 = vmatpush.msra.mxu0 %v103
    %127 = vmatpush.msra.mxu0 %v102
    %128 = vmatmul.f32.gmra.mxu0 %v110
    %v129 = vpop.f32.mrf.mxu0
    %v130 = vadd.f32 %v106, %v129
    %131 = vdwg.mxu0
    %v132 = vmax.f32 %v130, 0.0
    %v133 = vld [vmem:[#allocation8] sm:$0xff]
    %v134 = vld [vmem:[#allocation8 + $0x8] sm:$0xff]
    %v135 = vld [vmem:[#allocation8 + $0x10] sm:$0xff]
    %v136 = vld [vmem:[#allocation8 + $0x18] sm:$0xff]
    %v137 = vld [vmem:[#allocation8 + $0x20] sm:$0xff]
    %v138 = vld [vmem:[#allocation8 + $0x28] sm:$0xff]
    %v139 = vld [vmem:[#allocation8 + $0x30] sm:$0xff]
    %v140 = vld [vmem:[#allocation8 + $0x38] sm:$0xff]
    %v141 = vld [vmem:[#allocation8 + $0x40] sm:$0xff]
    %v142 = vld [vmem:[#allocation8 + $0x48] sm:$0xff]
    %v143 = vld [vmem:[#allocation8 + $0x50] sm:$0xff]
    %v144 = vld [vmem:[#allocation8 + $0x58] sm:$0xff]
    %v145 = vld [vmem:[#allocation8 + $0x60] sm:$0xff]
    %v146 = vld [vmem:[#allocation8 + $0x68] sm:$0xff]
    %v147 = vld [vmem:[#allocation8 + $0x70] sm:$0xff]
    %v148 = vld [vmem:[#allocation8 + $0x78] sm:$0xff]
    %v149 = vld [vmem:[%s4] sm:$0x1]
    %v151 = vperm.slane %v149, 0
    %153 = vmatpush.msra.mxu0 %v148
    %154 = vmatpush.msra.mxu0 %v147
    %155 = vmatpush.msra.mxu0 %v146
    %156 = vmatpush.msra.mxu0 %v145
    %157 = vmatpush.msra.mxu0 %v144
    %158 = vmatpush.msra.mxu0 %v143
    %159 = vmatpush.msra.mxu0 %v142
    %160 = vmatpush.msra.mxu0 %v141
    %161 = vmatpush.msra.mxu0 %v140
    %162 = vmatpush.msra.mxu0 %v139
    %163 = vmatpush.msra.mxu0 %v138
    %164 = vmatpush.msra.mxu0 %v137
    %165 = vmatpush.msra.mxu0 %v136
    %166 = vmatpush.msra.mxu0 %v135
    %167 = vmatpush.msra.mxu0 %v134
    %168 = vmatpush.msra.mxu0 %v133
    %169 = vmatmul.f32.gmra.mxu0 %v132
    %v170 = vpop.f32.mrf.mxu0
    %v171 = vadd.f32 %v151, %v170
    %172 = vdwg.mxu0
    %v173 = vmax.f32 %v171, 0.0
    %v174 = vld [vmem:[#allocation10] sm:$0xff]
    %v175 = vld [vmem:[#allocation10 + $0x8] sm:$0xff]
    %v176 = vld [vmem:[#allocation10 + $0x10] sm:$0xff]
    %v177 = vld [vmem:[#allocation10 + $0x18] sm:$0xff]
    %v178 = vld [vmem:[#allocation10 + $0x20] sm:$0xff]
    %v179 = vld [vmem:[#allocation10 + $0x28] sm:$0xff]
    %v180 = vld [vmem:[#allocation10 + $0x30] sm:$0xff]
    %v181 = vld [vmem:[#allocation10 + $0x38] sm:$0xff]
    %v182 = vld [vmem:[#allocation10 + $0x40] sm:$0xff]
    %v183 = vld [vmem:[#allocation10 + $0x48] sm:$0xff]
    %v184 = vld [vmem:[#allocation10 + $0x50] sm:$0xff]
    %v185 = vld [vmem:[#allocation10 + $0x58] sm:$0xff]
    %v186 = vld [vmem:[#allocation10 + $0x60] sm:$0xff]
    %v187 = vld [vmem:[#allocation10 + $0x68] sm:$0xff]
    %v188 = vld [vmem:[#allocation10 + $0x70] sm:$0xff]
    %v189 = vld [vmem:[#allocation10 + $0x78] sm:$0xff]
    %v190 = vld [vmem:[%s6] sm:$0x1]
    %v192 = vperm.slane %v190, 0
    %194 = vmatpush.msra.mxu0 %v189
    %195 = vmatpush.msra.mxu0 %v188
    %196 = vmatpush.msra.mxu0 %v187
    %197 = vmatpush.msra.mxu0 %v186
    %198 = vmatpush.msra.mxu0 %v185
    %199 = vmatpush.msra.mxu0 %v184
    %200 = vmatpush.msra.mxu0 %v183
    %201 = vmatpush.msra.mxu0 %v182
    %202 = vmatpush.msra.mxu0 %v181
    %203 = vmatpush.msra.mxu0 %v180
    %204 = vmatpush.msra.mxu0 %v179
    %205 = vmatpush.msra.mxu0 %v178
    %206 = vmatpush.msra.mxu0 %v177
    %207 = vmatpush.msra.mxu0 %v176
    %208 = vmatpush.msra.mxu0 %v175
    %209 = vmatpush.msra.mxu0 %v174
    %210 = vmatmul.f32.gmra.mxu0 %v173
    %v211 = vpop.f32.mrf.mxu0
    %v212 = vadd.f32 %v192, %v211
    %213 = vdwg.mxu0
    %214 = vmax.xlane.f32.xlu0 %v212
    %v215 = vpop.xlane.xlu0 %214
    %v216 = vsub.f32 %v212, %v215
    %v217 = vmul.f32 %v216, 1.442695
    %v218 = vpow.pop %v217
    %219 = vadd.xlane.f32.xlu0 %v218
    %v220 = vpop.xlane.xlu0 %219
    %v221 = vrcp.pop %v220
    %v222 = vmul.f32 %v220, %v221
    %v223 = vsub.f32 1.0, %v222
    %v224 = vmul.f32 %v221, %v223
    %v225 = vadd.f32 %v221, %v224
    %vm226 = vweird.f32 %v220
    %vm227 = vweird.f32 %v221
    %vm228 = vmor %vm226, %vm227
    %v229 = vsel %vm228, %v221, %v225
    %v230 = vand.u32 2147483647, %v220
    %vm231 = vcmp.eq.f32.partialorder %v230, 8.507059e+37
    %v232 = vand.u32 %v220, 2147483648
    %v233 = vor.u32 1.1754944e-38, %v232
    %v234 = vsel %vm231, %v233, %v229
    %v235 = vmul.f32 %v218, %v234
    %236 = vst [vmem:[#allocation11] sm:$0xff] %v235
    // Predicated region
    $region50: #{network_forward.1} parent=1 // pred_check
      _
    $region51: #{network_forward.1} parent=1 // pred_check_branch
      %238 = sbr.rel (0) target = $region53
    $region52: #{network_forward.1} parent=1 // pred_region
      %240 = vsyncadd [#allocation4], 0
      %s242 = sshll.u32 [#allocation11], 4
      %s243 = int_to_ptr.vmem [resolvable:$true] %s242
      %s244 = sshll.u32 %s7, 4
      %s245 = int_to_ptr.hbm [resolvable:$true] %s244
      %247 = dma.vmem_to_hbm [thread:$0]  %s243, 128, %s245, [#allocation4]
    $region53: #{network_forward.1} parent=1 // pred_fallthru
      _
    // Predicated region
    $region54: #{network_forward.1} parent=1 // pred_check
      _
    $region55: #{network_forward.1} parent=1 // pred_check_branch
      %249 = sbr.rel (0) target = $region57
    $region56: #{network_forward.1} parent=1 // pred_region
      %251 = dma.done [#allocation4], 128
    $region57: #{network_forward.1} parent=1 // pred_fallthru
      _
    %252 = vsyncpa [#allocation3], 1
    %253 = vsyncpa [#allocation6], 1
    %254 = vsyncpa [#allocation9], 1
    %255 = vsyncpa [#allocation4], 1

</llo_original>
